<compile_context>
chip_gen: v6e
topology: v6e:2x2x1
jax: 0.10.0
libtpu: 0.0.40
codegen_flags: <defaults>
</compile_context>

<pallas_src>
import functools

import jax
import jax.numpy as jnp
import numpy as np
from jax.experimental import pallas as pl
from jax.experimental.pallas import tpu as pltpu

LN_EPS = 1e-5  # nn.LayerNorm default


def _round_up(x, m):
    return ((x + m - 1) // m) * m


# ----------------------------------------------------------------------------
# Pallas kernel: matmul (== conv after im2col) + bias + LayerNorm(embed_dim).
# One grid step handles `tm` output rows; rows are independent under LayerNorm
# so the M grid axis is fully parallel (megacore-friendly).
# ----------------------------------------------------------------------------
def _proj_ln_kernel(p_ref, w_ref, b_ref, g_ref, beta_ref, o_ref, *, c_actual):
    # p_ref: [tm, CKKp] bf16   w_ref: [CKKp, Cp] bf16   b/g/beta: [1, Cp] f32
    acc = jnp.dot(p_ref[...], w_ref[...], preferred_element_type=jnp.float32)
    acc = acc + b_ref[...]                                   # conv bias

    # LayerNorm over the channel axis. Padded channels (index >= c_actual) are
    # exactly zero (zero weight columns + zero bias), so plain sums over the
    # padded width are correct; divide by the true embed_dim.
    inv_c = jnp.float32(1.0 / c_actual)
    mean = jnp.sum(acc, axis=-1, keepdims=True) * inv_c
    sumsq = jnp.sum(acc * acc, axis=-1, keepdims=True) * inv_c
    var = sumsq - mean * mean                                # biased variance
    inv_std = jax.lax.rsqrt(var + LN_EPS)
    y = (acc - mean) * inv_std * g_ref[...] + beta_ref[...]
    o_ref[...] = y.astype(o_ref.dtype)


# ----------------------------------------------------------------------------
# Glue: im2col (pure JAX slicing) and the pallas_call wrapper.
# ----------------------------------------------------------------------------
def _im2col(x, k, stride, padding):
    n, c, h, w = x.shape
    h_out = (h + 2 * padding - k) // stride + 1
    w_out = (w + 2 * padding - k) // stride + 1
    xp = jnp.pad(x, ((0, 0), (0, 0), (padding, padding), (padding, padding)))
    cols = []
    for kh in range(k):
        for kw in range(k):
            patch = xp[:, :, kh:kh + stride * h_out:stride,
                             kw:kw + stride * w_out:stride]   # [N,C,Ho,Wo]
            cols.append(patch)
    cols = jnp.stack(cols, axis=0).reshape(k, k, n, c, h_out, w_out)
    # -> [N, Ho, Wo, C, kh, kw] to match weight.reshape(Cout, Cin*K*K) order.
    cols = cols.transpose(2, 4, 5, 3, 0, 1)
    return cols.reshape(n * h_out * w_out, c * k * k), h_out, w_out


@functools.partial(jax.jit, static_argnames=("stride", "padding"))
def overlap_patch_embed(x, weight, bias, gamma, beta, *, stride, padding):
    """OverlapPatchEmbed forward.

    x:      [N, Cin, H, W]        (NCHW, as PyTorch)
    weight: [Cout, Cin, K, K]     conv weight
    bias:   [Cout]                conv bias
    gamma, beta: [Cout]           LayerNorm affine
    returns (seq [N, Hout*Wout, Cout], Hout, Wout)
    """
    n, c_in, h, w = x.shape
    c_out, _, k, _ = weight.shape

    patches, h_out, w_out = _im2col(x, k, stride, padding)
    m, ckk = patches.shape

    # Pad contraction and output-channel dims to 128 multiples (lane-dense MXU
    # and unmasked stores); pad M up to the tile size.
    ckk_p = _round_up(ckk, 128)
    c_p = _round_up(c_out, 128)
    tm = min(256, _round_up(m, 8))
    m_p = _round_up(m, tm)

    patches_p = jnp.pad(
        patches, ((0, m_p - m), (0, ckk_p - ckk))).astype(jnp.bfloat16)
    w2d = jnp.pad(
        weight.reshape(c_out, c_in * k * k).T,
        ((0, ckk_p - ckk), (0, c_p - c_out))).astype(jnp.bfloat16)
    b2d = jnp.pad(bias.reshape(1, c_out),
                  ((0, 0), (0, c_p - c_out))).astype(jnp.float32)
    g2d = jnp.pad(gamma.reshape(1, c_out),
                  ((0, 0), (0, c_p - c_out))).astype(jnp.float32)
    beta2d = jnp.pad(beta.reshape(1, c_out),
                     ((0, 0), (0, c_p - c_out))).astype(jnp.float32)

    kernel = functools.partial(_proj_ln_kernel, c_actual=c_out)

    out2d = pl.pallas_call(
        kernel,
        out_shape=jax.ShapeDtypeStruct((m_p, c_p), jnp.float32),
        grid=(m_p // tm,),
        in_specs=[
            pl.BlockSpec((tm, ckk_p), lambda i: (i, 0)),      # patches tile
            pl.BlockSpec((ckk_p, c_p), lambda i: (0, 0)),     # resident weight
            pl.BlockSpec((1, c_p), lambda i: (0, 0)),         # bias
            pl.BlockSpec((1, c_p), lambda i: (0, 0)),         # gamma
            pl.BlockSpec((1, c_p), lambda i: (0, 0)),         # beta
        ],
        out_specs=pl.BlockSpec((tm, c_p), lambda i: (i, 0)),
        compiler_params=pltpu.CompilerParams(
            dimension_semantics=("parallel",)),
    )(patches_p, w2d, b2d, g2d, beta2d)

    # [M_pad, Cp] -> valid rows/channels -> sequence layout [B, HW, C].
    seq = out2d[:m, :c_out].reshape(n, h_out * w_out, c_out)
    return seq, h_out, w_out


# ----------------------------------------------------------------------------
# Pure-JAX reference (same semantics) for a sanity check.
# ----------------------------------------------------------------------------
def _reference(x, weight, bias, gamma, beta, *, stride, padding):
    y = jax.lax.conv_general_dilated(
        x, weight,
        window_strides=(stride, stride),
        padding=((padding, padding), (padding, padding)),
        dimension_numbers=("NCHW", "OIHW", "NCHW"),
    )
    y = y + bias.reshape(1, -1, 1, 1)
    n, c, ho, wo = y.shape
    seq = y.reshape(n, c, ho * wo).transpose(0, 2, 1)         # [B, HW, C]
    mean = jnp.mean(seq, axis=-1, keepdims=True)
    var = jnp.mean((seq - mean) ** 2, axis=-1, keepdims=True)
    seq = (seq - mean) * jax.lax.rsqrt(var + LN_EPS)
    seq = seq * gamma.reshape(1, 1, -1) + beta.reshape(1, 1, -1)
    return seq, ho, wo


if __name__ == "__main__":
    def run_case(key, n, c_in, img, embed_dim, patch_size, stride):
        ks = jax.random.split(key, 5)
        padding = patch_size // 2
        x = jax.random.normal(ks[0], (n, c_in, img, img), dtype=jnp.float32)
        fan_out = patch_size * patch_size * embed_dim
        weight = jax.random.normal(
            ks[1], (embed_dim, c_in, patch_size, patch_size),
            dtype=jnp.float32) * np.sqrt(2.0 / fan_out)
        bias = 0.02 * jax.random.normal(ks[2], (embed_dim,), dtype=jnp.float32)
        gamma = 1.0 + 0.1 * jax.random.normal(ks[3], (embed_dim,),
                                              dtype=jnp.float32)
        beta = 0.1 * jax.random.normal(ks[4], (embed_dim,), dtype=jnp.float32)

        out, h_out, w_out = overlap_patch_embed(
            x, weight, bias, gamma, beta, stride=stride, padding=padding)
        out = jax.block_until_ready(out)

        ref, h_ref, w_ref = _reference(
            x, weight, bias, gamma, beta, stride=stride, padding=padding)
        assert int(h_out) == h_ref and int(w_out) == w_ref
        np.testing.assert_allclose(np.asarray(out), np.asarray(ref),
                                   rtol=2e-2, atol=2e-2)

    key = jax.random.PRNGKey(0)
    k1, k2 = jax.random.split(key)
    # Small config with the module's patchify structure (patch=7, stride=4).
    run_case(k1, n=2, c_in=3, img=16, embed_dim=32, patch_size=7, stride=4)
    # Slightly larger config that exercises a multi-tile (grid > 1) M axis.
    run_case(k2, n=2, c_in=3, img=64, embed_dim=64, patch_size=7, stride=4)

    print("KERNEL_OK")
</pallas_src>

<mosaic_0001>
module attributes {stable_mosaic.version = 11 : i64} {
  func.func @_proj_ln_kernel(%arg0: i32, %arg1: memref<32x256xbf16, #tpu.memory_space<vmem>>, %arg2: memref<256x128xbf16, #tpu.memory_space<vmem>>, %arg3: memref<1x128xf32, #tpu.memory_space<vmem>>, %arg4: memref<1x128xf32, #tpu.memory_space<vmem>>, %arg5: memref<1x128xf32, #tpu.memory_space<vmem>>, %arg6: memref<32x128xf32, #tpu.memory_space<vmem>>) attributes {dimension_semantics = [#tpu.dimension_semantics<parallel>], iteration_bounds = array<i64: 1>, scalar_prefetch = 0 : i64, scratch_operands = 0 : i64, tpu.core_type = #tpu.core_type<tc>, window_params = [{transform_indices = @transform_0, window_bounds = array<i64: 32, 256>}, {pipeline_mode = #tpu.pipeline_mode<synchronous>, transform_indices = @transform_1, window_bounds = array<i64: 256, 128>}, {pipeline_mode = #tpu.pipeline_mode<synchronous>, transform_indices = @transform_2, window_bounds = array<i64: 1, 128>}, {pipeline_mode = #tpu.pipeline_mode<synchronous>, transform_indices = @transform_3, window_bounds = array<i64: 1, 128>}, {pipeline_mode = #tpu.pipeline_mode<synchronous>, transform_indices = @transform_4, window_bounds = array<i64: 1, 128>}, {transform_indices = @transform_5, window_bounds = array<i64: 32, 128>}]} {
    %c0 = arith.constant 0 : index
    %c0_0 = arith.constant 0 : index
    %0 = vector.load %arg1[%c0, %c0_0] : memref<32x256xbf16, #tpu.memory_space<vmem>>, vector<32x256xbf16>
    %c0_1 = arith.constant 0 : index
    %c0_2 = arith.constant 0 : index
    %1 = vector.load %arg2[%c0_1, %c0_2] : memref<256x128xbf16, #tpu.memory_space<vmem>>, vector<256x128xbf16>
    %cst = arith.constant dense<0.000000e+00> : vector<32x128xf32>
    %2 = tpu.matmul %0, %1, %cst {dimension_numbers = #tpu.dot_dimension_numbers<[1], [0], [0], [1], [0, 0, 1, 1], [], []>} : vector<32x256xbf16>, vector<256x128xbf16>, vector<32x128xf32> -> vector<32x128xf32>
    %c0_3 = arith.constant 0 : index
    %c0_4 = arith.constant 0 : index
    %3 = vector.load %arg3[%c0_3, %c0_4] : memref<1x128xf32, #tpu.memory_space<vmem>>, vector<1x128xf32>
    %4 = vector.broadcast %3 : vector<1x128xf32> to vector<32x128xf32>
    %5 = arith.addf %2, %4 : vector<32x128xf32>
    %cst_5 = arith.constant dense<0.000000e+00> : vector<32xf32>
    %6 = vector.multi_reduction <add>, %5, %cst_5 [1] : vector<32x128xf32> to vector<32xf32>
    %7 = vector.shape_cast %6 : vector<32xf32> to vector<32x1xf32>
    %cst_6 = arith.constant 3.125000e-02 : f32
    %8 = vector.broadcast %cst_6 : f32 to vector<32x1xf32>
    %9 = arith.mulf %7, %8 : vector<32x1xf32>
    %10 = arith.mulf %5, %5 : vector<32x128xf32>
    %cst_7 = arith.constant dense<0.000000e+00> : vector<32xf32>
    %11 = vector.multi_reduction <add>, %10, %cst_7 [1] : vector<32x128xf32> to vector<32xf32>
    %12 = vector.shape_cast %11 : vector<32xf32> to vector<32x1xf32>
    %cst_8 = arith.constant 3.125000e-02 : f32
    %13 = vector.broadcast %cst_8 : f32 to vector<32x1xf32>
    %14 = arith.mulf %12, %13 : vector<32x1xf32>
    %15 = arith.mulf %9, %9 : vector<32x1xf32>
    %16 = arith.subf %14, %15 : vector<32x1xf32>
    %cst_9 = arith.constant 9.99999974E-6 : f32
    %17 = vector.broadcast %cst_9 : f32 to vector<32x1xf32>
    %18 = arith.addf %16, %17 : vector<32x1xf32>
    %19 = math.rsqrt %18 : vector<32x1xf32>
    %20 = vector.broadcast %9 : vector<32x1xf32> to vector<32x128xf32>
    %21 = arith.subf %5, %20 : vector<32x128xf32>
    %22 = vector.broadcast %19 : vector<32x1xf32> to vector<32x128xf32>
    %23 = arith.mulf %21, %22 : vector<32x128xf32>
    %c0_10 = arith.constant 0 : index
    %c0_11 = arith.constant 0 : index
    %24 = vector.load %arg4[%c0_10, %c0_11] : memref<1x128xf32, #tpu.memory_space<vmem>>, vector<1x128xf32>
    %25 = vector.broadcast %24 : vector<1x128xf32> to vector<32x128xf32>
    %26 = arith.mulf %23, %25 : vector<32x128xf32>
    %c0_12 = arith.constant 0 : index
    %c0_13 = arith.constant 0 : index
    %27 = vector.load %arg5[%c0_12, %c0_13] : memref<1x128xf32, #tpu.memory_space<vmem>>, vector<1x128xf32>
    %28 = vector.broadcast %27 : vector<1x128xf32> to vector<32x128xf32>
    %29 = arith.addf %26, %28 : vector<32x128xf32>
    %c0_14 = arith.constant 0 : index
    %c0_15 = arith.constant 0 : index
    %30 = vector.load %arg6[%c0_14, %c0_15] : memref<32x128xf32, #tpu.memory_space<vmem>>, vector<32x128xf32>
    tpu.vector_store %arg6[%c0_14, %c0_15], %29 {strides = array<i32>} : memref<32x128xf32, #tpu.memory_space<vmem>>, vector<32x128xf32>,
    return
  }
  func.func @transform_0(%arg0: i32) -> (i32, i32) {
    %c0_i32 = arith.constant 0 : i32
    %c0_i32_0 = arith.constant 0 : i32
    return %arg0, %c0_i32 : i32, i32
  }
  func.func @transform_1(%arg0: i32) -> (i32, i32) {
    %c0_i32 = arith.constant 0 : i32
    %c0_i32_0 = arith.constant 0 : i32
    %c0_i32_1 = arith.constant 0 : i32
    return %c0_i32, %c0_i32_0 : i32, i32
  }
  func.func @transform_2(%arg0: i32) -> (i32, i32) {
    %c0_i32 = arith.constant 0 : i32
    %c0_i32_0 = arith.constant 0 : i32
    %c0_i32_1 = arith.constant 0 : i32
    return %c0_i32, %c0_i32_0 : i32, i32
  }
  func.func @transform_3(%arg0: i32) -> (i32, i32) {
    %c0_i32 = arith.constant 0 : i32
    %c0_i32_0 = arith.constant 0 : i32
    %c0_i32_1 = arith.constant 0 : i32
    return %c0_i32, %c0_i32_0 : i32, i32
  }
  func.func @transform_4(%arg0: i32) -> (i32, i32) {
    %c0_i32 = arith.constant 0 : i32
    %c0_i32_0 = arith.constant 0 : i32
    %c0_i32_1 = arith.constant 0 : i32
    return %c0_i32, %c0_i32_0 : i32, i32
  }
  func.func @transform_5(%arg0: i32) -> (i32, i32) {
    %c0_i32 = arith.constant 0 : i32
    %c0_i32_0 = arith.constant 0 : i32
    return %arg0, %c0_i32 : i32, i32
  }
}

</mosaic_0001>

<llo_original>
// kernel: overlap_patch_embed.1
$region0: #{overlap_patch_embed.1}
  #allocation0 [shape = 'u32[]', space=smem, size = 0x4, offset = 0x4, fixed_abs, tag = 'smem constant byte address 0x4 - core index']
  #allocation1 [shape = 'u32[144,128]{1,0:T(1,128)}', space=vmem, size = 0x12000, scoped, tag = 'internal scratch']
  %s0 = inlined_call_operand.vmem [shape: bf16[32,256], index: 0, kind: input, shape index: {}]
  %s1 = inlined_call_operand.vmem [shape: bf16[256,128], index: 1, kind: input, shape index: {}]
  %s2 = inlined_call_operand.vmem [shape: f32[1,128], index: 2, kind: input, shape index: {}]
  %s3 = inlined_call_operand.vmem [shape: f32[1,128], index: 3, kind: input, shape index: {}]
  %s4 = inlined_call_operand.vmem [shape: f32[1,128], index: 4, kind: input, shape index: {}]
  %s5 = inlined_call_operand.hbm [shape: f32[32,128], index: 5, kind: output, shape index: {}]
  %s6 = sld [smem:[#allocation0]]
  $region30: #{overlap_patch_embed.1} parent=0
    _
  %s8 = ssub.s32 1, %s6
  %s9 = scalar_select 0, %s8, %s6
  $region1: #{overlap_patch_embed.1} parent=0
    #allocation2 [shape = 'u8[16384]{0}', space=vmem, size = 0x4000, scoped, tag = 'output window, operand 0, single buffered']
    #allocation3 [shape = 's32[1]{0}', space=sflag, size = 0x4, scoped, tag = 'scoped memory for overlap_patch_embed.1']
    %10 = vsyncpa [#allocation3], 0
    // Predicated region
    $region2: #{overlap_patch_embed.1} parent=1 // pred_check
      _
    $region3: #{overlap_patch_embed.1} parent=1 // pred_check_branch
      %12 = sbr.rel (0) target = $region5
    $region4: #{overlap_patch_embed.1} parent=1 // pred_region
      _
    $region5: #{overlap_patch_embed.1} parent=1 // pred_fallthru
      _
    // Predicated region
    $region6: #{overlap_patch_embed.1} parent=1 // pred_check
      _
    $region7: #{overlap_patch_embed.1} parent=1 // pred_check_branch
      %14 = sbr.rel (0) target = $region9
    $region8: #{overlap_patch_embed.1} parent=1 // pred_region
      _
    $region9: #{overlap_patch_embed.1} parent=1 // pred_fallthru
      _
    // Predicated region
    $region10: #{overlap_patch_embed.1} parent=1 // pred_check
      _
    $region11: #{overlap_patch_embed.1} parent=1 // pred_check_branch
      %16 = sbr.rel (0) target = $region13
    $region12: #{overlap_patch_embed.1} parent=1 // pred_region
      _
    $region13: #{overlap_patch_embed.1} parent=1 // pred_fallthru
      _
    // Predicated region
    $region14: #{overlap_patch_embed.1} parent=1 // pred_check
      _
    $region15: #{overlap_patch_embed.1} parent=1 // pred_check_branch
      %18 = sbr.rel (0) target = $region17
    $region16: #{overlap_patch_embed.1} parent=1 // pred_region
      _
    $region17: #{overlap_patch_embed.1} parent=1 // pred_fallthru
      _
    // Predicated region
    $region18: #{overlap_patch_embed.1} parent=1 // pred_check
      _
    $region19: #{overlap_patch_embed.1} parent=1 // pred_check_branch
      %20 = sbr.rel (0) target = $region21
    $region20: #{overlap_patch_embed.1} parent=1 // pred_region
      _
    $region21: #{overlap_patch_embed.1} parent=1 // pred_fallthru
      _
    %v22 = vld [vmem:[%s0] sm:$0xff]
    %v23 = vld [vmem:[%s0 + $0x8] sm:$0xff]
    %v24 = vld [vmem:[%s0 + $0x10] sm:$0xff]
    %v25 = vld [vmem:[%s0 + $0x18] sm:$0xff]
    %v26 = vld [vmem:[%s1] sm:$0xf]
    %v27 = vld [vmem:[%s1 + $0x4] sm:$0xf]
    %v28 = vld [vmem:[%s1 + $0x8] sm:$0xf]
    %v29 = vld [vmem:[%s1 + $0xc] sm:$0xf]
    %v30 = vld [vmem:[%s1 + $0x10] sm:$0xf]
    %v31 = vld [vmem:[%s1 + $0x14] sm:$0xf]
    %v32 = vld [vmem:[%s1 + $0x18] sm:$0xf]
    %v33 = vld [vmem:[%s1 + $0x1c] sm:$0xf]
    %v34 = vld [vmem:[%s1 + $0x20] sm:$0xf]
    %v35 = vld [vmem:[%s1 + $0x24] sm:$0xf]
    %v36 = vld [vmem:[%s1 + $0x28] sm:$0xf]
    %v37 = vld [vmem:[%s1 + $0x2c] sm:$0xf]
    %v38 = vld [vmem:[%s1 + $0x30] sm:$0xf]
    %v39 = vld [vmem:[%s1 + $0x34] sm:$0xf]
    %v40 = vld [vmem:[%s1 + $0x38] sm:$0xf]
    %v41 = vld [vmem:[%s1 + $0x3c] sm:$0xf]
    %v42 = vld [vmem:[%s1 + $0x40] sm:$0xf]
    %v43 = vld [vmem:[%s1 + $0x44] sm:$0xf]
    %v44 = vld [vmem:[%s1 + $0x48] sm:$0xf]
    %v45 = vld [vmem:[%s1 + $0x4c] sm:$0xf]
    %v46 = vld [vmem:[%s1 + $0x50] sm:$0xf]
    %v47 = vld [vmem:[%s1 + $0x54] sm:$0xf]
    %v48 = vld [vmem:[%s1 + $0x58] sm:$0xf]
    %v49 = vld [vmem:[%s1 + $0x5c] sm:$0xf]
    %v50 = vld [vmem:[%s1 + $0x60] sm:$0xf]
    %v51 = vld [vmem:[%s1 + $0x64] sm:$0xf]
    %v52 = vld [vmem:[%s1 + $0x68] sm:$0xf]
    %v53 = vld [vmem:[%s1 + $0x6c] sm:$0xf]
    %v54 = vld [vmem:[%s1 + $0x70] sm:$0xf]
    %v55 = vld [vmem:[%s1 + $0x74] sm:$0xf]
    %v56 = vld [vmem:[%s1 + $0x78] sm:$0xf]
    %v57 = vld [vmem:[%s1 + $0x7c] sm:$0xf]
    %v58 = vld [vmem:[%s2] sm:$0x1]
    %v60 = vlaneseq
    %v61 = vshrl.u32 %v60, 7
    %v62 = vsub.s32 0, %v61
    %v63 = vrot.slane %v58, %v62
    %v69 = vunpack.c.l.b16 %v22
    %v70 = vunpack.c.h.b16 %v22
    %v71 = vunpack.c.l.b16 %v23
    %v72 = vunpack.c.h.b16 %v23
    %v73 = vunpack.c.l.b16 %v24
    %v74 = vunpack.c.h.b16 %v24
    %v75 = vunpack.c.l.b16 %v25
    %v76 = vunpack.c.h.b16 %v25
    %v77 = vpack.c.b16 %v71, %v69
    %v78 = vpack.c.b16 %v72, %v70
    %v79 = vpack.c.b16 %v75, %v73
    %v80 = vpack.c.b16 %v76, %v74
    %v117 = vunpack.c.l.b16 %v26
    %v118 = vunpack.c.l.b16 %v27
    %v119 = vunpack.c.l.b16 %v28
    %v120 = vunpack.c.l.b16 %v29
    %v121 = vunpack.c.l.b16 %v30
    %v122 = vunpack.c.l.b16 %v31
    %v123 = vunpack.c.l.b16 %v32
    %v124 = vunpack.c.l.b16 %v33
    %v125 = vunpack.c.l.b16 %v34
    %v126 = vunpack.c.l.b16 %v35
    %v127 = vunpack.c.l.b16 %v36
    %v128 = vunpack.c.l.b16 %v37
    %v129 = vunpack.c.l.b16 %v38
    %v130 = vunpack.c.l.b16 %v39
    %v131 = vunpack.c.l.b16 %v40
    %v132 = vunpack.c.l.b16 %v41
    %v133 = vunpack.c.l.b16 %v42
    %v134 = vunpack.c.l.b16 %v43
    %v135 = vunpack.c.l.b16 %v44
    %v136 = vunpack.c.l.b16 %v45
    %v137 = vunpack.c.l.b16 %v46
    %v138 = vunpack.c.l.b16 %v47
    %v139 = vunpack.c.l.b16 %v48
    %v140 = vunpack.c.l.b16 %v49
    %v141 = vunpack.c.l.b16 %v50
    %v142 = vunpack.c.l.b16 %v51
    %v143 = vunpack.c.l.b16 %v52
    %v144 = vunpack.c.l.b16 %v53
    %v145 = vunpack.c.l.b16 %v54
    %v146 = vunpack.c.l.b16 %v55
    %v147 = vunpack.c.l.b16 %v56
    %v148 = vunpack.c.l.b16 %v57
    %v149 = vpack.c.b16 %v118, %v117
    %v150 = vpack.c.b16 %v120, %v119
    %v151 = vpack.c.b16 %v122, %v121
    %v152 = vpack.c.b16 %v124, %v123
    %v153 = vpack.c.b16 %v126, %v125
    %v154 = vpack.c.b16 %v128, %v127
    %v155 = vpack.c.b16 %v130, %v129
    %v156 = vpack.c.b16 %v132, %v131
    %v157 = vpack.c.b16 %v134, %v133
    %v158 = vpack.c.b16 %v136, %v135
    %v159 = vpack.c.b16 %v138, %v137
    %v160 = vpack.c.b16 %v140, %v139
    %v161 = vpack.c.b16 %v142, %v141
    %v162 = vpack.c.b16 %v144, %v143
    %v163 = vpack.c.b16 %v146, %v145
    %v164 = vpack.c.b16 %v148, %v147
    %181 = vmatprep.subr.bf16.mxu0 0
    %182 = vmatpush1.bf16.msra.mxu0 %v156
    %183 = vmatprep.subr.bf16.mxu0 0
    %184 = vmatpush1.bf16.msra.mxu0 %v155
    %185 = vmatprep.subr.bf16.mxu0 0
    %186 = vmatpush1.bf16.msra.mxu0 %v154
    %187 = vmatprep.subr.bf16.mxu0 0
    %188 = vmatpush1.bf16.msra.mxu0 %v153
    %189 = vmatprep.subr.bf16.mxu0 0
    %190 = vmatpush1.bf16.msra.mxu0 %v152
    %191 = vmatprep.subr.bf16.mxu0 0
    %192 = vmatpush1.bf16.msra.mxu0 %v151
    %193 = vmatprep.subr.bf16.mxu0 0
    %194 = vmatpush1.bf16.msra.mxu0 %v150
    %195 = vmatprep.subr.bf16.mxu0 0
    %196 = vmatpush1.bf16.msra.mxu0 %v149
    %197 = vmatprep.subr.bf16.mxu0 0
    %198 = vmatpush2.bf16.msra.mxu0 %v164
    %199 = vmatprep.subr.bf16.mxu0 0
    %200 = vmatpush2.bf16.msra.mxu0 %v163
    %201 = vmatprep.subr.bf16.mxu0 0
    %202 = vmatpush2.bf16.msra.mxu0 %v162
    %203 = vmatprep.subr.bf16.mxu0 0
    %204 = vmatpush2.bf16.msra.mxu0 %v161
    %205 = vmatprep.subr.bf16.mxu0 0
    %206 = vmatpush2.bf16.msra.mxu0 %v160
    %207 = vmatprep.subr.bf16.mxu0 0
    %208 = vmatpush2.bf16.msra.mxu0 %v159
    %209 = vmatprep.subr.bf16.mxu0 0
    %210 = vmatpush2.bf16.msra.mxu0 %v158
    %211 = vmatprep.subr.bf16.mxu0 0
    %212 = vmatpush2.bf16.msra.mxu0 %v157
    %213 = vmatprep.mubr.bf16.mxu0 %v78
    %214 = vmatmul.mubr.bf16.gmra.mxu0 %v77
    %v215 = vpop.f32.mrf.mxu0
    %v216 = vadd.f32 %v63, %v215
    %v217 = vpop.f32.mrf.mxu0
    %v218 = vpop.f32.mrf.mxu0
    %v219 = vadd.f32 %v63, %v218
    %v220 = vpop.f32.mrf.mxu0
    %221 = vmatprep.mubr.bf16.mxu0 %v80
    %222 = vmatmul.mubr.bf16.gmra.mxu0 %v79
    %v223 = vpop.f32.mrf.mxu0
    %v224 = vadd.f32 %v63, %v223
    %v225 = vpop.f32.mrf.mxu0
    %v226 = vpop.f32.mrf.mxu0
    %v227 = vadd.f32 %v63, %v226
    %v228 = vpop.f32.mrf.mxu0
    %229 = vdwg.mxu0
    %230 = vadd.xlane.f32.xlu0 %v216
    %v231 = vpop.xlane.xlu0 %230
    %232 = vadd.xlane.f32.xlu0 %v219
    %v233 = vpop.xlane.xlu0 %232
    %234 = vadd.xlane.f32.xlu0 %v224
    %v235 = vpop.xlane.xlu0 %234
    %236 = vadd.xlane.f32.xlu0 %v227
    %v237 = vpop.xlane.xlu0 %236
    %v238 = vmul.f32 %v231, 0.03125
    %v239 = vmul.f32 %v233, 0.03125
    %v240 = vmul.f32 %v235, 0.03125
    %v241 = vmul.f32 %v237, 0.03125
    %v242 = vmul.f32 %v216, %v216
    %v243 = vmul.f32 %v219, %v219
    %v244 = vmul.f32 %v224, %v224
    %v245 = vmul.f32 %v227, %v227
    %246 = vadd.xlane.f32.xlu0 %v242
    %v247 = vpop.xlane.xlu0 %246
    %248 = vadd.xlane.f32.xlu0 %v243
    %v249 = vpop.xlane.xlu0 %248
    %250 = vadd.xlane.f32.xlu0 %v244
    %v251 = vpop.xlane.xlu0 %250
    %252 = vadd.xlane.f32.xlu0 %v245
    %v253 = vpop.xlane.xlu0 %252
    %v254 = vmul.f32 %v247, 0.03125
    %v255 = vmul.f32 %v249, 0.03125
    %v256 = vmul.f32 %v251, 0.03125
    %v257 = vmul.f32 %v253, 0.03125
    %v258 = vmul.f32 %v238, %v238
    %v259 = vmul.f32 %v239, %v239
    %v260 = vmul.f32 %v240, %v240
    %v261 = vmul.f32 %v241, %v241
    %v262 = vsub.f32 %v254, %v258
    %v263 = vsub.f32 %v255, %v259
    %v264 = vsub.f32 %v256, %v260
    %v265 = vsub.f32 %v257, %v261
    %v266 = vadd.f32 %v262, 1e-05
    %v267 = vadd.f32 %v263, 1e-05
    %v268 = vadd.f32 %v264, 1e-05
    %v269 = vadd.f32 %v265, 1e-05
    %v270 = vrsqrt.pop %v266
    %v271 = vrsqrt.pop %v267
    %v272 = vrsqrt.pop %v268
    %v273 = vrsqrt.pop %v269
    %v274 = vsub.f32 %v216, %v238
    %v275 = vsub.f32 %v219, %v239
    %v276 = vsub.f32 %v224, %v240
    %v277 = vsub.f32 %v227, %v241
    %v278 = vmul.f32 %v274, %v270
    %v279 = vmul.f32 %v275, %v271
    %v280 = vmul.f32 %v276, %v272
    %v281 = vmul.f32 %v277, %v273
    %v282 = vld [vmem:[%s3] sm:$0x1]
    %v284 = vlaneseq
    %v285 = vshrl.u32 %v284, 7
    %v286 = vsub.s32 0, %v285
    %v287 = vrot.slane %v282, %v286
    %v289 = vmul.f32 %v278, %v287
    %v290 = vmul.f32 %v279, %v287
    %v291 = vmul.f32 %v280, %v287
    %v292 = vmul.f32 %v281, %v287
    %v293 = vld [vmem:[%s4] sm:$0x1]
    %v295 = vlaneseq
    %v296 = vshrl.u32 %v295, 7
    %v297 = vsub.s32 0, %v296
    %v298 = vrot.slane %v293, %v297
    %v300 = vadd.f32 %v289, %v298
    %v301 = vadd.f32 %v290, %v298
    %v302 = vadd.f32 %v291, %v298
    %v303 = vadd.f32 %v292, %v298
    %304 = vst [vmem:[#allocation2] sm:$0xff] %v300
    %305 = vst [vmem:[#allocation2 + $0x8] sm:$0xff] %v301
    %306 = vst [vmem:[#allocation2 + $0x10] sm:$0xff] %v302
    %307 = vst [vmem:[#allocation2 + $0x18] sm:$0xff] %v303
    // Predicated region
    $region22: #{overlap_patch_embed.1} parent=1 // pred_check
      _
    $region23: #{overlap_patch_embed.1} parent=1 // pred_check_branch
      %309 = sbr.rel (0) target = $region25
    $region24: #{overlap_patch_embed.1} parent=1 // pred_region
      %s311 = ssub.s32 512, 512
      %312 = vsyncadd [#allocation3], %s311
      %s313 = sshll.u32 [#allocation2], 4
      %s314 = int_to_ptr.vmem [resolvable:$true] %s313
      %319 = dma.vmem_to_hbm [thread:$0]  %s314, 512, %s5, [#allocation3], 128, 128, 8
    $region25: #{overlap_patch_embed.1} parent=1 // pred_fallthru
      _
    // Predicated region
    $region26: #{overlap_patch_embed.1} parent=1 // pred_check
      _
    $region27: #{overlap_patch_embed.1} parent=1 // pred_check_branch
      %321 = sbr.rel (0) target = $region29
    $region28: #{overlap_patch_embed.1} parent=1 // pred_region
      %322 = dma.done [#allocation3], 512
    $region29: #{overlap_patch_embed.1} parent=1 // pred_fallthru
      _
    %323 = vsyncpa [#allocation3], 1

</llo_original>
